<compile_context>
chip_gen: v7x
topology: tpu7x:2x2x1
jax: 0.10.0
libtpu: 0.0.40
codegen_flags: <defaults>
</compile_context>

<pallas_src>
import functools

import jax
import jax.numpy as jnp
from jax import lax
from jax.experimental import pallas as pl
from jax.experimental.pallas import tpu as pltpu


_VMEM_LIMIT = 48 * 1024 * 1024   # fits v7x (64 MiB/TC) with headroom; << v5e/v6e


def _round_up(x, m):
    return ((x + m - 1) // m) * m


def _pick_tile(dim, candidates):
    for t in candidates:
        if dim % t == 0:
            return t
    return dim


def _pick_tm(m, cap=1024):
    if m >= cap:
        return cap
    return max(8, _round_up(m, 8))


def _choose_mn_tiles(m, npad):
    """Pick (TM, TN, Mpad); split TM when the parallel grid would collapse to
    a single block (keeps both v7x TensorCores busy)."""
    tn = _pick_tile(npad, (512, 256, 128))
    tm = _pick_tm(m)
    mp = _round_up(m, tm)
    if mp // tm == 1 and npad // tn == 1 and tm >= 512:
        tm = _round_up(tm // 2, 8)
        mp = _round_up(m, tm)
    return tm, tn, mp


def _pad_k(k):
    # Pad packed-weight K so TK is at least 256 (never the 128 fallback).
    if k <= 128:
        return k
    if k % 256 == 0:
        return k
    return _round_up(k, 256)


# --------------------------------------------------------------------------
# Kernel A: plain GEMM  out = relu?(A @ B + bias (+ residual)), bf16 out.
#   A: (TM, TK) bf16, B: (TK, TN) bf16, bias: (1, TN) f32,
#   res: (TM, TN) bf16, acc scratch: (TM, TN) f32 resident across K.
# --------------------------------------------------------------------------
def _gemm_kernel(a_ref, b_ref, bias_ref, *rest, relu, has_res):
    if has_res:
        res_ref, o_ref, acc_ref = rest
    else:
        o_ref, acc_ref = rest

    k = pl.program_id(2)

    @pl.when(k == 0)
    def _():
        acc_ref[...] = jnp.zeros_like(acc_ref)

    acc_ref[...] += jnp.dot(a_ref[...], b_ref[...],
                            preferred_element_type=jnp.float32)

    @pl.when(k == pl.num_programs(2) - 1)
    def _():
        r = acc_ref[...] + bias_ref[...]
        if has_res:
            r = r + res_ref[...].astype(jnp.float32)
        if relu:
            r = jnp.maximum(r, 0.0)
        o_ref[...] = r.astype(o_ref.dtype)


def pallas_gemm(a, b_padded, bias_padded, residual, relu, n_out):
    """a: (M, K) bf16; b_padded: (Kp, Np) bf16; bias: (1, Np) f32;
    residual: (M, n_out) bf16 or None. Returns (M, n_out) bf16."""
    M, K = a.shape
    Kp, Np = b_padded.shape

    TM, TN, Mp = _choose_mn_tiles(M, Np)
    TK = _pick_tile(Kp, (512, 256, 128))

    if a.dtype != jnp.bfloat16:
        a = a.astype(jnp.bfloat16)
    if Mp != M or Kp != K:
        a = jnp.pad(a, ((0, Mp - M), (0, Kp - K)))

    has_res = residual is not None
    inputs = [a, b_padded, bias_padded]
    in_specs = [
        pl.BlockSpec((TM, TK), lambda m, n, k: (m, k)),
        pl.BlockSpec((TK, TN), lambda m, n, k: (k, n)),
        pl.BlockSpec((1, TN), lambda m, n, k: (0, n)),
    ]
    if has_res:
        res = residual.astype(jnp.bfloat16)
        if Mp != M or Np != n_out:
            res = jnp.pad(res, ((0, Mp - M), (0, Np - n_out)))
        inputs.append(res)
        in_specs.append(pl.BlockSpec((TM, TN), lambda m, n, k: (m, n)))

    out = pl.pallas_call(
        functools.partial(_gemm_kernel, relu=relu, has_res=has_res),
        out_shape=jax.ShapeDtypeStruct((Mp, Np), jnp.bfloat16),
        grid_spec=pltpu.PrefetchScalarGridSpec(
            num_scalar_prefetch=0,
            grid=(Mp // TM, Np // TN, Kp // TK),
            in_specs=in_specs,
            out_specs=pl.BlockSpec((TM, TN), lambda m, n, k: (m, n)),
            scratch_shapes=[pltpu.VMEM((TM, TN), jnp.float32)],
        ),
        compiler_params=pltpu.CompilerParams(
            dimension_semantics=("parallel", "parallel", "arbitrary"),
            vmem_limit_bytes=_VMEM_LIMIT),
    )(*inputs)
    return out[:M, :n_out]


# --------------------------------------------------------------------------
# Kernel B: tap-decomposed kh x kw (stride 1, "same") conv.
#   A stays in HBM (pl.ANY) as the flattened spatially-padded activation.
#   Per grid step (m, n, k): for each kernel row i we DMA one halo'd row band
#   (TM + HALO rows of TK channels) into a double-buffered VMEM scratch and
#   run kw shifted matmuls (static column-tap offsets j*d), accumulating into
#   a resident f32 scratch.  Epilogue fuses bias / ReLU and stores bf16.
# --------------------------------------------------------------------------
def _tap_gemm_kernel(a_hbm, b_ref, bias_ref, o_ref, abuf, sem, acc_ref, *,
                     tm, tk, halo, kh, kw, dil, wrow, relu):
    m = pl.program_id(0)
    k = pl.program_id(2)
    row0 = pl.multiple_of(m * tm, 8)
    col0 = k * tk

    @pl.when(k == 0)
    def _():
        acc_ref[...] = jnp.zeros_like(acc_ref)

    def make_copy(i, slot):
        src = a_hbm.at[pl.ds(row0 + i * dil * wrow, tm + halo),
                       pl.ds(col0, tk)]
        return pltpu.make_async_copy(src, abuf.at[slot], sem.at[slot])

    cps = [make_copy(0, 0)]
    cps[0].start()
    for i in range(kh):                      # static unroll over kernel rows
        slot = i % 2
        if i + 1 < kh:                       # prefetch next row band
            cps.append(make_copy(i + 1, (i + 1) % 2))
            cps[i + 1].start()
        cps[i].wait()
        for j in range(kw):                  # static column taps from VMEM
            a_tap = abuf[slot, j * dil: j * dil + tm, :]
            acc_ref[...] += jnp.dot(a_tap, b_ref[i * kw + j],
                                    preferred_element_type=jnp.float32)

    @pl.when(k == pl.num_programs(2) - 1)
    def _():
        r = acc_ref[...] + bias_ref[...]
        if relu:
            r = jnp.maximum(r, 0.0)
        o_ref[...] = r.astype(o_ref.dtype)


@functools.partial(jax.jit,
                   static_argnames=("kh", "kw", "cout", "dilation", "relu"))
def _conv_taps(x, w3, bias, *, kh, kw, cout, dilation, relu):
    """Stride-1 'same' conv (padding == dilation*(kh-1)//2), NHWC bf16."""
    assert kh == kw
    n, h, w, cin = x.shape
    d = dilation
    p = d * (kh - 1) // 2
    hs = h + 2 * p
    wp = w + 2 * p
    wrow = _round_up(wp, 8)          # keep row-band DMA starts 8-aligned
    xp = jnp.pad(x.astype(jnp.bfloat16),
                 ((0, 0), (p, p), (p, p + wrow - wp), (0, 0)))
    m_ext = n * hs * wrow

    t_taps, _, npad = w3.shape        # (kh*kw, cin, Np)
    TM, TN, m_pad = _choose_mn_tiles(m_ext, npad)
    TK = _pick_tile(cin, (512, 256, 128))
    halo = _round_up((kw - 1) * d, 8)
    guard = (kh - 1) * d * wrow + halo + (m_pad - m_ext)

    a_flat = jnp.pad(xp.reshape(m_ext, cin), ((0, guard), (0, 0)))

    out = pl.pallas_call(
        functools.partial(_tap_gemm_kernel, tm=TM, tk=TK, halo=halo,
                          kh=kh, kw=kw, dil=d, wrow=wrow, relu=relu),
        out_shape=jax.ShapeDtypeStruct((m_pad, npad), jnp.bfloat16),
        grid_spec=pltpu.PrefetchScalarGridSpec(
            num_scalar_prefetch=0,
            grid=(m_pad // TM, npad // TN, cin // TK),
            in_specs=[
                pl.BlockSpec(memory_space=pl.ANY),                     # A (HBM)
                pl.BlockSpec((t_taps, TK, TN), lambda m, nn, k: (0, k, nn)),
                pl.BlockSpec((1, TN), lambda m, nn, k: (0, nn)),
            ],
            out_specs=pl.BlockSpec((TM, TN), lambda m, nn, k: (m, nn)),
            scratch_shapes=[
                pltpu.VMEM((2, TM + halo, TK), jnp.bfloat16),  # A double buffer
                pltpu.SemaphoreType.DMA((2,)),
                pltpu.VMEM((TM, TN), jnp.float32),             # accumulator
            ],
        ),
        compiler_params=pltpu.CompilerParams(
            dimension_semantics=("parallel", "parallel", "arbitrary"),
            vmem_limit_bytes=_VMEM_LIMIT),
    )(a_flat, w3, bias)

    out = out[:m_ext, :cout].reshape(n, hs, wrow, cout)[:, :h, :w, :]
    return out


# --------------------------------------------------------------------------
# im2col fallback (stem 7x7 s2 and the single stride-2 3x3) + 1x1 path
# --------------------------------------------------------------------------
def _im2col_nhwc(x, kh, kw, stride, dilation, padding):
    n, h, w, c = x.shape
    xp = jnp.pad(x, ((0, 0), (padding, padding), (padding, padding), (0, 0)))
    oh = (h + 2 * padding - dilation * (kh - 1) - 1) // stride + 1
    ow = (w + 2 * padding - dilation * (kw - 1) - 1) // stride + 1
    taps = []
    for i in range(kh):
        for j in range(kw):
            taps.append(
                xp[:,
                   i * dilation: i * dilation + (oh - 1) * stride + 1: stride,
                   j * dilation: j * dilation + (ow - 1) * stride + 1: stride,
                   :])
    col = jnp.stack(taps, axis=3).reshape(n * oh * ow, kh * kw * c)
    return col, oh, ow


@functools.partial(
    jax.jit,
    static_argnames=("kh", "kw", "cout", "stride", "dilation", "padding",
                     "relu"))
def _conv_gemm(x, wmat, bias, residual, *, kh, kw, cout, stride, dilation,
               padding, relu):
    n, h, w, cin = x.shape
    xb = x.astype(jnp.bfloat16)
    if kh == 1 and kw == 1 and padding == 0:
        xs = xb[:, ::stride, ::stride, :] if stride > 1 else xb
        oh, ow = xs.shape[1], xs.shape[2]
        col = xs.reshape(n * oh * ow, cin)        # NHWC: 1x1 im2col is free
    else:
        col, oh, ow = _im2col_nhwc(xb, kh, kw, stride, dilation, padding)
    res = residual.reshape(n * oh * ow, cout) if residual is not None else None
    out = pallas_gemm(col, wmat, bias, res, relu, cout)
    return out.reshape(n, oh, ow, cout)


def conv(x, cw, *, stride=1, dilation=1, padding=0, relu=True, residual=None):
    if cw["mode"] == "taps":
        assert stride == 1 and residual is None
        assert padding == dilation * (cw["kh"] - 1) // 2
        return _conv_taps(x, cw["w"], cw["b"], kh=cw["kh"], kw=cw["kw"],
                          cout=cw["cout"], dilation=dilation, relu=relu)
    return _conv_gemm(x, cw["w"], cw["b"], residual, kh=cw["kh"], kw=cw["kw"],
                      cout=cw["cout"], stride=stride, dilation=dilation,
                      padding=padding, relu=relu)


# --------------------------------------------------------------------------
# Glue ops (NHWC): maxpool, bilinear resize (align_corners=False semantics)
# --------------------------------------------------------------------------
def maxpool3x3_s2(x):
    return lax.reduce_window(
        x, jnp.array(-jnp.inf, x.dtype), lax.max,
        window_dimensions=(1, 3, 3, 1),
        window_strides=(1, 2, 2, 1),
        padding=((0, 0), (1, 1), (1, 1), (0, 0)))


def bilinear_resize(x, oh, ow):
    n, h, w, c = x.shape
    if h == oh and w == ow:
        return x

    def src_idx(out_size, in_size):
        scale = in_size / out_size
        src = jnp.clip(
            (jnp.arange(out_size, dtype=jnp.float32) + 0.5) * scale - 0.5,
            0.0, None)
        i0 = jnp.minimum(jnp.floor(src).astype(jnp.int32), in_size - 1)
        i1 = jnp.minimum(i0 + 1, in_size - 1)
        frac = src - i0.astype(jnp.float32)
        return i0, i1, frac

    y0, y1, fy = src_idx(oh, h)
    x0, x1, fx = src_idx(ow, w)
    fy = fy[None, :, None, None]
    fx = fx[None, None, :, None]

    row0 = x[:, y0, :, :]
    row1 = x[:, y1, :, :]
    top = row0[:, :, x0, :] * (1.0 - fx) + row0[:, :, x1, :] * fx
    bot = row1[:, :, x0, :] * (1.0 - fx) + row1[:, :, x1, :] * fx
    return top * (1.0 - fy) + bot * fy


# --------------------------------------------------------------------------
# Deterministic parameters (ResNet-101 backbone + DeepLabV3 head), pre-packed
# once into padded bf16 GEMM matrices (either (Kp, Np) or (taps, Cin, Np)).
# --------------------------------------------------------------------------
def _pack_gemm(w, bias=None):
    cout, cin, kh, kw = w.shape
    k = cin * kh * kw
    wmat = jnp.transpose(w, (2, 3, 1, 0)).reshape(k, cout)
    kp = _pad_k(k)
    npad = _round_up(cout, 128)
    wmat = jnp.pad(wmat, ((0, kp - k), (0, npad - cout))).astype(jnp.bfloat16)
    if bias is None:
        bias = jnp.zeros((cout,), jnp.float32)
    bias_p = jnp.pad(bias.astype(jnp.float32), (0, npad - cout)).reshape(1, npad)
    return {"mode": "gemm", "w": wmat, "b": bias_p,
            "cout": cout, "kh": kh, "kw": kw}


def _pack_taps(w, bias=None):
    cout, cin, kh, kw = w.shape
    npad = _round_up(cout, 128)
    w3 = jnp.transpose(w, (2, 3, 1, 0)).reshape(kh * kw, cin, cout)
    w3 = jnp.pad(w3, ((0, 0), (0, 0), (0, npad - cout))).astype(jnp.bfloat16)
    if bias is None:
        bias = jnp.zeros((cout,), jnp.float32)
    bias_p = jnp.pad(bias.astype(jnp.float32), (0, npad - cout)).reshape(1, npad)
    return {"mode": "taps", "w": w3, "b": bias_p,
            "cout": cout, "kh": kh, "kw": kw}


class ParamGen:
    def __init__(self, seed):
        self.key = jax.random.PRNGKey(seed)

    def _next(self):
        self.key, sub = jax.random.split(self.key)
        return sub

    def raw(self, cout, cin, kh, kw, bn=True, with_bias=False):
        fan_in = cin * kh * kw
        w = jax.random.normal(self._next(), (cout, cin, kh, kw), jnp.float32)
        w = w * (2.0 / fan_in) ** 0.5
        if bn:
            # fold identity-stat BatchNorm (gamma=1, beta=0, mean=0, var=1, eps)
            w = w * (1.0 / (1.0 + 1e-5)) ** 0.5
        bias = None
        if with_bias:
            bias = jax.random.normal(self._next(), (cout,), jnp.float32) * 0.01
        return w, bias


def build_params(seed=0):
    pg = ParamGen(seed)
    P = {"stem": _pack_gemm(*pg.raw(64, 3, 7, 7))}

    def make_layer(inplanes, planes, blocks, stride, dilate, dilation):
        prev_dil = dilation
        if dilate:
            dilation *= stride
            stride = 1
        layer = []
        conv2_pack = _pack_taps if stride == 1 else _pack_gemm
        b0 = {"conv1": _pack_gemm(*pg.raw(planes, inplanes, 1, 1)),
              "conv2": conv2_pack(*pg.raw(planes, planes, 3, 3)),
              "conv3": _pack_gemm(*pg.raw(planes * 4, planes, 1, 1)),
              "stride": stride, "dilation": prev_dil}
        if stride != 1 or inplanes != planes * 4:
            b0["down"] = _pack_gemm(*pg.raw(planes * 4, inplanes, 1, 1))
        layer.append(b0)
        inplanes = planes * 4
        for _ in range(1, blocks):
            layer.append({"conv1": _pack_gemm(*pg.raw(planes, inplanes, 1, 1)),
                          "conv2": _pack_taps(*pg.raw(planes, planes, 3, 3)),
                          "conv3": _pack_gemm(*pg.raw(planes * 4, planes, 1, 1)),
                          "stride": 1, "dilation": dilation})
        return layer, inplanes, dilation

    inplanes, dilation = 64, 1
    P["layer1"], inplanes, dilation = make_layer(inplanes, 64, 3, 1, False, dilation)
    P["layer2"], inplanes, dilation = make_layer(inplanes, 128, 4, 2, False, dilation)
    P["layer3"], inplanes, dilation = make_layer(inplanes, 256, 23, 2, True, dilation)
    P["layer4"], inplanes, dilation = make_layer(inplanes, 512, 3, 2, True, dilation)

    # ASPP (rates 12, 24, 36)
    P["aspp0"] = _pack_gemm(*pg.raw(256, 2048, 1, 1))
    P["aspp_r"] = [_pack_taps(*pg.raw(256, 2048, 3, 3)) for _ in range(3)]
    P["aspp_pool"] = _pack_gemm(*pg.raw(256, 2048, 1, 1))
    P["aspp_proj"] = _pack_gemm(*pg.raw(256, 1280, 1, 1))
    # DeepLabHead tail; classifier[4] replaced with Conv2d(256, 2, 1)
    P["head_conv"] = _pack_taps(*pg.raw(256, 256, 3, 3))
    P["cls"] = _pack_gemm(*pg.raw(2, 256, 1, 1, bn=False, with_bias=True))
    # FCN aux head (present because pretrained=True => aux_loss=True)
    P["aux_conv"] = _pack_taps(*pg.raw(256, 1024, 3, 3))
    P["aux_cls"] = _pack_gemm(*pg.raw(21, 256, 1, 1, bn=False, with_bias=True))
    return P


# --------------------------------------------------------------------------
# Forward pass (bf16 NHWC internally; NCHW f32 at the module boundary)
# --------------------------------------------------------------------------
def bottleneck(x, bp):
    out = conv(x, bp["conv1"], relu=True)
    out = conv(out, bp["conv2"], stride=bp["stride"],
               dilation=bp["dilation"], padding=bp["dilation"], relu=True)
    if "down" in bp:
        identity = conv(x, bp["down"], stride=bp["stride"], relu=False)
    else:
        identity = x
    # conv3 + BN + residual add + ReLU fused in the GEMM epilogue
    return conv(out, bp["conv3"], relu=True, residual=identity)


def unet_forward(x_nchw, P):
    in_h, in_w = x_nchw.shape[2], x_nchw.shape[3]
    x = jnp.transpose(x_nchw, (0, 2, 3, 1)).astype(jnp.bfloat16)

    # ResNet-101 backbone (output stride 8: layer3/4 dilated)
    h = conv(x, P["stem"], stride=2, padding=3, relu=True)
    h = maxpool3x3_s2(h)
    for bp in P["layer1"]:
        h = bottleneck(h, bp)
    for bp in P["layer2"]:
        h = bottleneck(h, bp)
    for bp in P["layer3"]:
        h = bottleneck(h, bp)
    aux_feat = h
    for bp in P["layer4"]:
        h = bottleneck(h, bp)

    # ASPP
    rates = (12, 24, 36)
    branches = [conv(h, P["aspp0"], relu=True)]
    for r, cw in zip(rates, P["aspp_r"]):
        branches.append(conv(h, cw, dilation=r, padding=r, relu=True))
    pooled = jnp.mean(h.astype(jnp.float32), axis=(1, 2), keepdims=True)
    pooled = conv(pooled.astype(jnp.bfloat16), P["aspp_pool"], relu=True)
    pooled = bilinear_resize(pooled, h.shape[1], h.shape[2]).astype(jnp.bfloat16)
    branches.append(pooled)
    # TODO(synk): the bf16 concat could be fused into the projection GEMM
    # (K split per branch); it is a small fraction of traffic so kept explicit.
    cat = jnp.concatenate(branches, axis=-1)
    z = conv(cat, P["aspp_proj"], relu=True)
    # TODO(synk): Dropout(0.5) of the ASPP projection skipped (eval semantics).

    # DeepLabHead tail + replaced 1x1 classifier (256 -> 2)
    z = conv(z, P["head_conv"], padding=1, relu=True)
    logits = conv(z, P["cls"], relu=False)
    out = bilinear_resize(logits.astype(jnp.float32), in_h, in_w)

    # Aux FCN head (1024 -> 256 -> 21)
    a = conv(aux_feat, P["aux_conv"], padding=1, relu=True)
    # TODO(synk): Dropout(0.1) of the aux head skipped (eval semantics).
    a = conv(a, P["aux_cls"], relu=False)
    aux = bilinear_resize(a.astype(jnp.float32), in_h, in_w)

    return {"out": jnp.transpose(out, (0, 3, 1, 2)),
            "aux": jnp.transpose(aux, (0, 3, 1, 2))}


if __name__ == "__main__":
    key = jax.random.PRNGKey(0)
    x = jax.random.normal(key, (2, 3, 16, 16), jnp.float32)
    params = build_params(seed=0)
    result = unet_forward(x, params)
    jax.block_until_ready(result)
    assert result["out"].shape == (2, 2, 16, 16)
    assert result["aux"].shape == (2, 21, 16, 16)
    assert bool(jnp.all(jnp.isfinite(result["out"])))
    print("KERNEL_OK")
</pallas_src>

<mosaic_0001>
module attributes {stable_mosaic.version = 11 : i64} {
  func.func @_gemm_kernel(%arg0: i32, %arg1: i32, %arg2: i32, %arg3: memref<128x256xbf16, #tpu.memory_space<vmem>>, %arg4: memref<256x128xbf16, #tpu.memory_space<vmem>>, %arg5: memref<1x128xf32, #tpu.memory_space<vmem>>, %arg6: memref<128x128xbf16, #tpu.memory_space<vmem>>, %arg7: memref<128x128xf32, #tpu.memory_space<vmem>>) attributes {dimension_semantics = [#tpu.dimension_semantics<parallel>, #tpu.dimension_semantics<parallel>, #tpu.dimension_semantics<arbitrary>], iteration_bounds = array<i64: 1, 1, 1>, scalar_prefetch = 0 : i64, scratch_operands = 1 : i64, tpu.core_type = #tpu.core_type<tc>, window_params = [{transform_indices = @transform_0, window_bounds = array<i64: 128, 256>}, {transform_indices = @transform_1, window_bounds = array<i64: 256, 128>}, {transform_indices = @transform_2, window_bounds = array<i64: 1, 128>}, {transform_indices = @transform_3, window_bounds = array<i64: 128, 128>}]} {
    %c0_i32 = arith.constant 0 : i32
    %0 = arith.cmpi eq, %arg2, %c0_i32 : i32
    %1 = arith.extui %0 : i1 to i32
    %c0_i32_0 = arith.constant 0 : i32
    %2 = arith.cmpi ne, %1, %c0_i32_0 : i32
    scf.if %2 {
      %cst_10 = arith.constant 0.000000e+00 : f32
      %12 = vector.broadcast %cst_10 : f32 to vector<128x128xf32>
      %c0_11 = arith.constant 0 : index
      %c0_12 = arith.constant 0 : index
      %13 = vector.load %arg7[%c0_11, %c0_12] : memref<128x128xf32, #tpu.memory_space<vmem>>, vector<128x128xf32>
      tpu.vector_store %arg7[%c0_11, %c0_12], %12 {strides = array<i32>} : memref<128x128xf32, #tpu.memory_space<vmem>>, vector<128x128xf32>,
    } else {
    }
    %c0 = arith.constant 0 : index
    %c0_1 = arith.constant 0 : index
    %3 = vector.load %arg7[%c0, %c0_1] : memref<128x128xf32, #tpu.memory_space<vmem>>, vector<128x128xf32>
    %c0_2 = arith.constant 0 : index
    %c0_3 = arith.constant 0 : index
    %4 = vector.load %arg3[%c0_2, %c0_3] : memref<128x256xbf16, #tpu.memory_space<vmem>>, vector<128x256xbf16>
    %c0_4 = arith.constant 0 : index
    %c0_5 = arith.constant 0 : index
    %5 = vector.load %arg4[%c0_4, %c0_5] : memref<256x128xbf16, #tpu.memory_space<vmem>>, vector<256x128xbf16>
    %cst = arith.constant dense<0.000000e+00> : vector<128x128xf32>
    %6 = tpu.matmul %4, %5, %cst {dimension_numbers = #tpu.dot_dimension_numbers<[1], [0], [0], [1], [0, 0, 1, 1], [], []>} : vector<128x256xbf16>, vector<256x128xbf16>, vector<128x128xf32> -> vector<128x128xf32>
    %7 = arith.addf %3, %6 : vector<128x128xf32>
    %c0_6 = arith.constant 0 : index
    %c0_7 = arith.constant 0 : index
    %8 = vector.load %arg7[%c0_6, %c0_7] : memref<128x128xf32, #tpu.memory_space<vmem>>, vector<128x128xf32>
    tpu.vector_store %arg7[%c0_6, %c0_7], %7 {strides = array<i32>} : memref<128x128xf32, #tpu.memory_space<vmem>>, vector<128x128xf32>,
    %c0_i32_8 = arith.constant 0 : i32
    %9 = arith.cmpi eq, %arg2, %c0_i32_8 : i32
    %10 = arith.extui %9 : i1 to i32
    %c0_i32_9 = arith.constant 0 : i32
    %11 = arith.cmpi ne, %10, %c0_i32_9 : i32
    scf.if %11 {
      %c0_10 = arith.constant 0 : index
      %c0_11 = arith.constant 0 : index
      %12 = vector.load %arg7[%c0_10, %c0_11] : memref<128x128xf32, #tpu.memory_space<vmem>>, vector<128x128xf32>
      %c0_12 = arith.constant 0 : index
      %c0_13 = arith.constant 0 : index
      %13 = vector.load %arg5[%c0_12, %c0_13] : memref<1x128xf32, #tpu.memory_space<vmem>>, vector<1x128xf32>
      %14 = vector.broadcast %13 : vector<1x128xf32> to vector<128x128xf32>
      %15 = arith.addf %12, %14 : vector<128x128xf32>
      %cst_14 = arith.constant 0.000000e+00 : f32
      %16 = vector.broadcast %cst_14 : f32 to vector<128x128xf32>
      %17 = arith.maximumf %15, %16 : vector<128x128xf32>
      %18 = arith.truncf %17 : vector<128x128xf32> to vector<128x128xbf16>
      %c0_15 = arith.constant 0 : index
      %c0_16 = arith.constant 0 : index
      %19 = vector.load %arg6[%c0_15, %c0_16] : memref<128x128xbf16, #tpu.memory_space<vmem>>, vector<128x128xbf16>
      tpu.vector_store %arg6[%c0_15, %c0_16], %18 {strides = array<i32>} : memref<128x128xbf16, #tpu.memory_space<vmem>>, vector<128x128xbf16>,
    } else {
    }
    return
  }
  func.func @transform_0(%arg0: i32, %arg1: i32, %arg2: i32) -> (i32, i32) {
    %c0_i32 = arith.constant 0 : i32
    return %arg0, %arg2 : i32, i32
  }
  func.func @transform_1(%arg0: i32, %arg1: i32, %arg2: i32) -> (i32, i32) {
    %c0_i32 = arith.constant 0 : i32
    return %arg2, %arg1 : i32, i32
  }
  func.func @transform_2(%arg0: i32, %arg1: i32, %arg2: i32) -> (i32, i32) {
    %c0_i32 = arith.constant 0 : i32
    %c0_i32_0 = arith.constant 0 : i32
    return %c0_i32, %arg1 : i32, i32
  }
  func.func @transform_3(%arg0: i32, %arg1: i32, %arg2: i32) -> (i32, i32) {
    %c0_i32 = arith.constant 0 : i32
    return %arg0, %arg1 : i32, i32
  }
}

</mosaic_0001>

<llo_original>
// kernel: _conv_gemm.1
$region0: #{_conv_gemm.1}
  #allocation0 [shape = 'u32[]', space=smem, size = 0x4, offset = 0x4, fixed_abs, tag = 'smem constant byte address 0x4 - core index']
  #allocation1 [shape = 'u32[144,128]{1,0:T(1,128)}', space=vmem, size = 0x12000, scoped, tag = 'internal scratch']
  #allocation2 [shape = 'f32[128,128]{1,0:T(8,128)}', space=vmem, size = 0x10000, scoped, tag = 'scratch operand']
  %s0 = inlined_call_operand.vmem [shape: bf16[128,256], index: 0, kind: input, shape index: {}]
  %s1 = inlined_call_operand.vmem [shape: bf16[256,128], index: 1, kind: input, shape index: {}]
  %s2 = inlined_call_operand.vmem [shape: f32[1,128], index: 2, kind: input, shape index: {}]
  %s3 = inlined_call_operand.hbm [shape: bf16[128,128], index: 3, kind: output, shape index: {}]
  %s4 = sld [smem:[#allocation0]]
  $region30: #{_conv_gemm.1} parent=0
    _
  %s6 = ssub.s32 1, %s4
  %s7 = scalar_select 0, %s6, %s4
  $region1: #{_conv_gemm.1} parent=0
    #allocation3 [shape = 'u8[32768]{0}', space=vmem, size = 0x8000, scoped, tag = 'output window, operand 0, single buffered']
    #allocation4 [shape = 's32[1]{0}', space=sflag, size = 0x4, scoped, tag = 'scoped memory for _conv_gemm.1']
    %8 = vsyncpa [#allocation4], 0
    // Predicated region
    $region2: #{_conv_gemm.1} parent=1 // pred_check
      _
    $region3: #{_conv_gemm.1} parent=1 // pred_check_branch
      %10 = sbr.rel (0) target = $region5
    $region4: #{_conv_gemm.1} parent=1 // pred_region
      _
    $region5: #{_conv_gemm.1} parent=1 // pred_fallthru
      _
    // Predicated region
    $region6: #{_conv_gemm.1} parent=1 // pred_check
      _
    $region7: #{_conv_gemm.1} parent=1 // pred_check_branch
      %12 = sbr.rel (0) target = $region9
    $region8: #{_conv_gemm.1} parent=1 // pred_region
      _
    $region9: #{_conv_gemm.1} parent=1 // pred_fallthru
      _
    // Predicated region
    $region10: #{_conv_gemm.1} parent=1 // pred_check
      _
    $region11: #{_conv_gemm.1} parent=1 // pred_check_branch
      %14 = sbr.rel (0) target = $region13
    $region12: #{_conv_gemm.1} parent=1 // pred_region
      _
    $region13: #{_conv_gemm.1} parent=1 // pred_fallthru
      _
    %p16 = scmp.eq.s32.totalorder 0, 0
    // Predicated region
    $region14: #{_conv_gemm.1} parent=1 // pred_check
      %p17 = pneg %p16
    $region15: #{_conv_gemm.1} parent=1 // pred_check_branch
      %19 = sbr.rel (%p17) target = $region17
    $region16: #{_conv_gemm.1} parent=1 // pred_region
      %20 = vst [vmem:[#allocation2] sm:$0xff] 0.0
      %21 = vst [vmem:[#allocation2 + $0x8] sm:$0xff] 0.0
      %22 = vst [vmem:[#allocation2 + $0x10] sm:$0xff] 0.0
      %23 = vst [vmem:[#allocation2 + $0x18] sm:$0xff] 0.0
      %24 = vst [vmem:[#allocation2 + $0x20] sm:$0xff] 0.0
      %25 = vst [vmem:[#allocation2 + $0x28] sm:$0xff] 0.0
      %26 = vst [vmem:[#allocation2 + $0x30] sm:$0xff] 0.0
      %27 = vst [vmem:[#allocation2 + $0x38] sm:$0xff] 0.0
      %28 = vst [vmem:[#allocation2 + $0x40] sm:$0xff] 0.0
      %29 = vst [vmem:[#allocation2 + $0x48] sm:$0xff] 0.0
      %30 = vst [vmem:[#allocation2 + $0x50] sm:$0xff] 0.0
      %31 = vst [vmem:[#allocation2 + $0x58] sm:$0xff] 0.0
      %32 = vst [vmem:[#allocation2 + $0x60] sm:$0xff] 0.0
      %33 = vst [vmem:[#allocation2 + $0x68] sm:$0xff] 0.0
      %34 = vst [vmem:[#allocation2 + $0x70] sm:$0xff] 0.0
      %35 = vst [vmem:[#allocation2 + $0x78] sm:$0xff] 0.0
    $region17: #{_conv_gemm.1} parent=1 // pred_fallthru
      _
    %v36 = vld [vmem:[#allocation2] sm:$0xff]
    %v37 = vld [vmem:[#allocation2 + $0x8] sm:$0xff]
    %v38 = vld [vmem:[#allocation2 + $0x10] sm:$0xff]
    %v39 = vld [vmem:[#allocation2 + $0x18] sm:$0xff]
    %v40 = vld [vmem:[#allocation2 + $0x20] sm:$0xff]
    %v41 = vld [vmem:[#allocation2 + $0x28] sm:$0xff]
    %v42 = vld [vmem:[#allocation2 + $0x30] sm:$0xff]
    %v43 = vld [vmem:[#allocation2 + $0x38] sm:$0xff]
    %v44 = vld [vmem:[#allocation2 + $0x40] sm:$0xff]
    %v45 = vld [vmem:[#allocation2 + $0x48] sm:$0xff]
    %v46 = vld [vmem:[#allocation2 + $0x50] sm:$0xff]
    %v47 = vld [vmem:[#allocation2 + $0x58] sm:$0xff]
    %v48 = vld [vmem:[#allocation2 + $0x60] sm:$0xff]
    %v49 = vld [vmem:[#allocation2 + $0x68] sm:$0xff]
    %v50 = vld [vmem:[#allocation2 + $0x70] sm:$0xff]
    %v51 = vld [vmem:[#allocation2 + $0x78] sm:$0xff]
    %v52 = vld [vmem:[%s0] sm:$0xff]
    %v53 = vld [vmem:[%s0 + $0x8] sm:$0xff]
    %v54 = vld [vmem:[%s0 + $0x10] sm:$0xff]
    %v55 = vld [vmem:[%s0 + $0x18] sm:$0xff]
    %v56 = vld [vmem:[%s0 + $0x20] sm:$0xff]
    %v57 = vld [vmem:[%s0 + $0x28] sm:$0xff]
    %v58 = vld [vmem:[%s0 + $0x30] sm:$0xff]
    %v59 = vld [vmem:[%s0 + $0x38] sm:$0xff]
    %v60 = vld [vmem:[%s0 + $0x40] sm:$0xff]
    %v61 = vld [vmem:[%s0 + $0x48] sm:$0xff]
    %v62 = vld [vmem:[%s0 + $0x50] sm:$0xff]
    %v63 = vld [vmem:[%s0 + $0x58] sm:$0xff]
    %v64 = vld [vmem:[%s0 + $0x60] sm:$0xff]
    %v65 = vld [vmem:[%s0 + $0x68] sm:$0xff]
    %v66 = vld [vmem:[%s0 + $0x70] sm:$0xff]
    %v67 = vld [vmem:[%s0 + $0x78] sm:$0xff]
    %v68 = vld [vmem:[%s1] sm:$0xf]
    %v69 = vld [vmem:[%s1 + $0x4] sm:$0xf]
    %v70 = vld [vmem:[%s1 + $0x8] sm:$0xf]
    %v71 = vld [vmem:[%s1 + $0xc] sm:$0xf]
    %v72 = vld [vmem:[%s1 + $0x10] sm:$0xf]
    %v73 = vld [vmem:[%s1 + $0x14] sm:$0xf]
    %v74 = vld [vmem:[%s1 + $0x18] sm:$0xf]
    %v75 = vld [vmem:[%s1 + $0x1c] sm:$0xf]
    %v76 = vld [vmem:[%s1 + $0x20] sm:$0xf]
    %v77 = vld [vmem:[%s1 + $0x24] sm:$0xf]
    %v78 = vld [vmem:[%s1 + $0x28] sm:$0xf]
    %v79 = vld [vmem:[%s1 + $0x2c] sm:$0xf]
    %v80 = vld [vmem:[%s1 + $0x30] sm:$0xf]
    %v81 = vld [vmem:[%s1 + $0x34] sm:$0xf]
    %v82 = vld [vmem:[%s1 + $0x38] sm:$0xf]
    %v83 = vld [vmem:[%s1 + $0x3c] sm:$0xf]
    %v84 = vld [vmem:[%s1 + $0x40] sm:$0xf]
    %v85 = vld [vmem:[%s1 + $0x44] sm:$0xf]
    %v86 = vld [vmem:[%s1 + $0x48] sm:$0xf]
    %v87 = vld [vmem:[%s1 + $0x4c] sm:$0xf]
    %v88 = vld [vmem:[%s1 + $0x50] sm:$0xf]
    %v89 = vld [vmem:[%s1 + $0x54] sm:$0xf]
    %v90 = vld [vmem:[%s1 + $0x58] sm:$0xf]
    %v91 = vld [vmem:[%s1 + $0x5c] sm:$0xf]
    %v92 = vld [vmem:[%s1 + $0x60] sm:$0xf]
    %v93 = vld [vmem:[%s1 + $0x64] sm:$0xf]
    %v94 = vld [vmem:[%s1 + $0x68] sm:$0xf]
    %v95 = vld [vmem:[%s1 + $0x6c] sm:$0xf]
    %v96 = vld [vmem:[%s1 + $0x70] sm:$0xf]
    %v97 = vld [vmem:[%s1 + $0x74] sm:$0xf]
    %v98 = vld [vmem:[%s1 + $0x78] sm:$0xf]
    %v99 = vld [vmem:[%s1 + $0x7c] sm:$0xf]
    %v116 = vunpack.c.l.b16 %v52
    %v117 = vunpack.c.h.b16 %v52
    %v118 = vunpack.c.l.b16 %v53
    %v119 = vunpack.c.h.b16 %v53
    %v120 = vunpack.c.l.b16 %v54
    %v121 = vunpack.c.h.b16 %v54
    %v122 = vunpack.c.l.b16 %v55
    %v123 = vunpack.c.h.b16 %v55
    %v124 = vunpack.c.l.b16 %v56
    %v125 = vunpack.c.h.b16 %v56
    %v126 = vunpack.c.l.b16 %v57
    %v127 = vunpack.c.h.b16 %v57
    %v128 = vunpack.c.l.b16 %v58
    %v129 = vunpack.c.h.b16 %v58
    %v130 = vunpack.c.l.b16 %v59
    %v131 = vunpack.c.h.b16 %v59
    %v132 = vunpack.c.l.b16 %v60
    %v133 = vunpack.c.h.b16 %v60
    %v134 = vunpack.c.l.b16 %v61
    %v135 = vunpack.c.h.b16 %v61
    %v136 = vunpack.c.l.b16 %v62
    %v137 = vunpack.c.h.b16 %v62
    %v138 = vunpack.c.l.b16 %v63
    %v139 = vunpack.c.h.b16 %v63
    %v140 = vunpack.c.l.b16 %v64
    %v141 = vunpack.c.h.b16 %v64
    %v142 = vunpack.c.l.b16 %v65
    %v143 = vunpack.c.h.b16 %v65
    %v144 = vunpack.c.l.b16 %v66
    %v145 = vunpack.c.h.b16 %v66
    %v146 = vunpack.c.l.b16 %v67
    %v147 = vunpack.c.h.b16 %v67
    %v148 = vpack.c.b16 %v118, %v116
    %v149 = vpack.c.b16 %v119, %v117
    %v150 = vpack.c.b16 %v122, %v120
    %v151 = vpack.c.b16 %v123, %v121
    %v152 = vpack.c.b16 %v126, %v124
    %v153 = vpack.c.b16 %v127, %v125
    %v154 = vpack.c.b16 %v130, %v128
    %v155 = vpack.c.b16 %v131, %v129
    %v156 = vpack.c.b16 %v134, %v132
    %v157 = vpack.c.b16 %v135, %v133
    %v158 = vpack.c.b16 %v138, %v136
    %v159 = vpack.c.b16 %v139, %v137
    %v160 = vpack.c.b16 %v142, %v140
    %v161 = vpack.c.b16 %v143, %v141
    %v162 = vpack.c.b16 %v146, %v144
    %v163 = vpack.c.b16 %v147, %v145
    %v212 = vunpack.c.l.b16 %v68
    %v213 = vunpack.c.l.b16 %v69
    %v214 = vunpack.c.l.b16 %v70
    %v215 = vunpack.c.l.b16 %v71
    %v216 = vunpack.c.l.b16 %v72
    %v217 = vunpack.c.l.b16 %v73
    %v218 = vunpack.c.l.b16 %v74
    %v219 = vunpack.c.l.b16 %v75
    %v220 = vunpack.c.l.b16 %v76
    %v221 = vunpack.c.l.b16 %v77
    %v222 = vunpack.c.l.b16 %v78
    %v223 = vunpack.c.l.b16 %v79
    %v224 = vunpack.c.l.b16 %v80
    %v225 = vunpack.c.l.b16 %v81
    %v226 = vunpack.c.l.b16 %v82
    %v227 = vunpack.c.l.b16 %v83
    %v228 = vunpack.c.l.b16 %v84
    %v229 = vunpack.c.l.b16 %v85
    %v230 = vunpack.c.l.b16 %v86
    %v231 = vunpack.c.l.b16 %v87
    %v232 = vunpack.c.l.b16 %v88
    %v233 = vunpack.c.l.b16 %v89
    %v234 = vunpack.c.l.b16 %v90
    %v235 = vunpack.c.l.b16 %v91
    %v236 = vunpack.c.l.b16 %v92
    %v237 = vunpack.c.l.b16 %v93
    %v238 = vunpack.c.l.b16 %v94
    %v239 = vunpack.c.l.b16 %v95
    %v240 = vunpack.c.l.b16 %v96
    %v241 = vunpack.c.l.b16 %v97
    %v242 = vunpack.c.l.b16 %v98
    %v243 = vunpack.c.l.b16 %v99
    %v244 = vpack.c.b16 %v213, %v212
    %v245 = vpack.c.b16 %v215, %v214
    %v246 = vpack.c.b16 %v217, %v216
    %v247 = vpack.c.b16 %v219, %v218
    %v248 = vpack.c.b16 %v221, %v220
    %v249 = vpack.c.b16 %v223, %v222
    %v250 = vpack.c.b16 %v225, %v224
    %v251 = vpack.c.b16 %v227, %v226
    %v252 = vpack.c.b16 %v229, %v228
    %v253 = vpack.c.b16 %v231, %v230
    %v254 = vpack.c.b16 %v233, %v232
    %v255 = vpack.c.b16 %v235, %v234
    %v256 = vpack.c.b16 %v237, %v236
    %v257 = vpack.c.b16 %v239, %v238
    %v258 = vpack.c.b16 %v241, %v240
    %v259 = vpack.c.b16 %v243, %v242
    %276 = vmatprep.subr.bf16.mxu0 0
    %277 = vmatpush1.bf16.msra.mxu0 %v244
    %278 = vmatprep.subr.bf16.mxu0 0
    %279 = vmatpush1.bf16.msra.mxu0 %v245
    %280 = vmatprep.subr.bf16.mxu0 0
    %281 = vmatpush1.bf16.msra.mxu0 %v246
    %282 = vmatprep.subr.bf16.mxu0 0
    %283 = vmatpush1.bf16.msra.mxu0 %v247
    %284 = vmatprep.subr.bf16.mxu0 0
    %285 = vmatpush1.bf16.msra.mxu0 %v248
    %286 = vmatprep.subr.bf16.mxu0 0
    %287 = vmatpush1.bf16.msra.mxu0 %v249
    %288 = vmatprep.subr.bf16.mxu0 0
    %289 = vmatpush1.bf16.msra.mxu0 %v250
    %290 = vmatprep.subr.bf16.mxu0 0
    %291 = vmatpush1.bf16.msra.mxu0 %v251
    %292 = vmatprep.subr.bf16.mxu0 0
    %293 = vmatpush1.bf16.msra.mxu0 %v252
    %294 = vmatprep.subr.bf16.mxu0 0
    %295 = vmatpush1.bf16.msra.mxu0 %v253
    %296 = vmatprep.subr.bf16.mxu0 0
    %297 = vmatpush1.bf16.msra.mxu0 %v254
    %298 = vmatprep.subr.bf16.mxu0 0
    %299 = vmatpush1.bf16.msra.mxu0 %v255
    %300 = vmatprep.subr.bf16.mxu0 0
    %301 = vmatpush1.bf16.msra.mxu0 %v256
    %302 = vmatprep.subr.bf16.mxu0 0
    %303 = vmatpush1.bf16.msra.mxu0 %v257
    %304 = vmatprep.subr.bf16.mxu0 0
    %305 = vmatpush1.bf16.msra.mxu0 %v258
    %306 = vmatprep.subr.bf16.mxu0 0
    %307 = vmatpush1.bf16.msra.mxu0 %v259
    %308 = vmatprep.mubr.bf16.mxu0 %v149
    %309 = vmatmul.mubr.bf16.gmra.mrb[0].mxu0 %v148
    %v310 = vpop.f32.mrb[0].mxu0
    %v311 = vadd.f32 0.0, %v310
    %v312 = vpop.f32.mrb[0].mxu0
    %v313 = vpop.f32.mrb[0].mxu0
    %v314 = vadd.f32 0.0, %v313
    %v315 = vpop.f32.mrb[0].mxu0
    %316 = vmatprep.mubr.bf16.mxu0 %v151
    %317 = vmatmul.mubr.bf16.gmra.mrb[0].mxu0 %v150
    %v318 = vpop.f32.mrb[0].mxu0
    %v319 = vadd.f32 0.0, %v318
    %v320 = vpop.f32.mrb[0].mxu0
    %v321 = vpop.f32.mrb[0].mxu0
    %v322 = vadd.f32 0.0, %v321
    %v323 = vpop.f32.mrb[0].mxu0
    %324 = vmatprep.mubr.bf16.mxu0 %v153
    %325 = vmatmul.mubr.bf16.gmra.mrb[0].mxu0 %v152
    %v326 = vpop.f32.mrb[0].mxu0
    %v327 = vadd.f32 0.0, %v326
    %v328 = vpop.f32.mrb[0].mxu0
    %v329 = vpop.f32.mrb[0].mxu0
    %v330 = vadd.f32 0.0, %v329
    %v331 = vpop.f32.mrb[0].mxu0
    %332 = vmatprep.mubr.bf16.mxu0 %v155
    %333 = vmatmul.mubr.bf16.gmra.mrb[0].mxu0 %v154
    %v334 = vpop.f32.mrb[0].mxu0
    %v335 = vadd.f32 0.0, %v334
    %v336 = vpop.f32.mrb[0].mxu0
    %v337 = vpop.f32.mrb[0].mxu0
    %v338 = vadd.f32 0.0, %v337
    %v339 = vpop.f32.mrb[0].mxu0
    %340 = vmatprep.mubr.bf16.mxu0 %v157
    %341 = vmatmul.mubr.bf16.gmra.mrb[0].mxu0 %v156
    %v342 = vpop.f32.mrb[0].mxu0
    %v343 = vadd.f32 0.0, %v342
    %v344 = vpop.f32.mrb[0].mxu0
    %v345 = vpop.f32.mrb[0].mxu0
    %v346 = vadd.f32 0.0, %v345
    %v347 = vpop.f32.mrb[0].mxu0
    %348 = vmatprep.mubr.bf16.mxu0 %v159
    %349 = vmatmul.mubr.bf16.gmra.mrb[0].mxu0 %v158
    %v350 = vpop.f32.mrb[0].mxu0
    %v351 = vadd.f32 0.0, %v350
    %v352 = vpop.f32.mrb[0].mxu0
    %v353 = vpop.f32.mrb[0].mxu0
    %v354 = vadd.f32 0.0, %v353
    %v355 = vpop.f32.mrb[0].mxu0
    %356 = vmatprep.mubr.bf16.mxu0 %v161
    %357 = vmatmul.mubr.bf16.gmra.mrb[0].mxu0 %v160
    %v358 = vpop.f32.mrb[0].mxu0
    %v359 = vadd.f32 0.0, %v358
    %v360 = vpop.f32.mrb[0].mxu0
    %v361 = vpop.f32.mrb[0].mxu0
    %v362 = vadd.f32 0.0, %v361
    %v363 = vpop.f32.mrb[0].mxu0
    %364 = vmatprep.mubr.bf16.mxu0 %v163
    %365 = vmatmul.mubr.bf16.gmra.mrb[0].mxu0 %v162
    %v366 = vpop.f32.mrb[0].mxu0
    %v367 = vadd.f32 0.0, %v366
    %v368 = vpop.f32.mrb[0].mxu0
    %v369 = vpop.f32.mrb[0].mxu0
    %v370 = vadd.f32 0.0, %v369
    %v371 = vpop.f32.mrb[0].mxu0
    %372 = vdwg.mxu0
    %v373 = vadd.f32 %v36, %v311
    %v374 = vadd.f32 %v37, %v314
    %v375 = vadd.f32 %v38, %v319
    %v376 = vadd.f32 %v39, %v322
    %v377 = vadd.f32 %v40, %v327
    %v378 = vadd.f32 %v41, %v330
    %v379 = vadd.f32 %v42, %v335
    %v380 = vadd.f32 %v43, %v338
    %v381 = vadd.f32 %v44, %v343
    %v382 = vadd.f32 %v45, %v346
    %v383 = vadd.f32 %v46, %v351
    %v384 = vadd.f32 %v47, %v354
    %v385 = vadd.f32 %v48, %v359
    %v386 = vadd.f32 %v49, %v362
    %v387 = vadd.f32 %v50, %v367
    %v388 = vadd.f32 %v51, %v370
    %389 = vst [vmem:[#allocation2] sm:$0xff] %v373
    %390 = vst [vmem:[#allocation2 + $0x8] sm:$0xff] %v374
    %391 = vst [vmem:[#allocation2 + $0x10] sm:$0xff] %v375
    %392 = vst [vmem:[#allocation2 + $0x18] sm:$0xff] %v376
    %393 = vst [vmem:[#allocation2 + $0x20] sm:$0xff] %v377
    %394 = vst [vmem:[#allocation2 + $0x28] sm:$0xff] %v378
    %395 = vst [vmem:[#allocation2 + $0x30] sm:$0xff] %v379
    %396 = vst [vmem:[#allocation2 + $0x38] sm:$0xff] %v380
    %397 = vst [vmem:[#allocation2 + $0x40] sm:$0xff] %v381
    %398 = vst [vmem:[#allocation2 + $0x48] sm:$0xff] %v382
    %399 = vst [vmem:[#allocation2 + $0x50] sm:$0xff] %v383
    %400 = vst [vmem:[#allocation2 + $0x58] sm:$0xff] %v384
    %401 = vst [vmem:[#allocation2 + $0x60] sm:$0xff] %v385
    %402 = vst [vmem:[#allocation2 + $0x68] sm:$0xff] %v386
    %403 = vst [vmem:[#allocation2 + $0x70] sm:$0xff] %v387
    %404 = vst [vmem:[#allocation2 + $0x78] sm:$0xff] %v388
    // Predicated region
    $region18: #{_conv_gemm.1} parent=1 // pred_check
      %p405 = pneg %p16
    $region19: #{_conv_gemm.1} parent=1 // pred_check_branch
      %407 = sbr.rel (%p405) target = $region21
    $region20: #{_conv_gemm.1} parent=1 // pred_region
      %v408 = vld [vmem:[#allocation2] sm:$0xff]
      %v409 = vld [vmem:[#allocation2 + $0x8] sm:$0xff]
      %v410 = vld [vmem:[#allocation2 + $0x10] sm:$0xff]
      %v411 = vld [vmem:[#allocation2 + $0x18] sm:$0xff]
      %v412 = vld [vmem:[#allocation2 + $0x20] sm:$0xff]
      %v413 = vld [vmem:[#allocation2 + $0x28] sm:$0xff]
      %v414 = vld [vmem:[#allocation2 + $0x30] sm:$0xff]
      %v415 = vld [vmem:[#allocation2 + $0x38] sm:$0xff]
      %v416 = vld [vmem:[#allocation2 + $0x40] sm:$0xff]
      %v417 = vld [vmem:[#allocation2 + $0x48] sm:$0xff]
      %v418 = vld [vmem:[#allocation2 + $0x50] sm:$0xff]
      %v419 = vld [vmem:[#allocation2 + $0x58] sm:$0xff]
      %v420 = vld [vmem:[#allocation2 + $0x60] sm:$0xff]
      %v421 = vld [vmem:[#allocation2 + $0x68] sm:$0xff]
      %v422 = vld [vmem:[#allocation2 + $0x70] sm:$0xff]
      %v423 = vld [vmem:[#allocation2 + $0x78] sm:$0xff]
      %v424 = vld [vmem:[%s2] sm:$0x1]
      %v426 = vlaneseq
      %v427 = vshrl.u32 %v426, 7
      %v428 = vsub.s32 0, %v427
      %v429 = vrot.slane %v424, %v428
      %v431 = vadd.f32 %v408, %v429
      %v432 = vadd.f32 %v409, %v429
      %v433 = vadd.f32 %v410, %v429
      %v434 = vadd.f32 %v411, %v429
      %v435 = vadd.f32 %v412, %v429
      %v436 = vadd.f32 %v413, %v429
      %v437 = vadd.f32 %v414, %v429
      %v438 = vadd.f32 %v415, %v429
      %v439 = vadd.f32 %v416, %v429
      %v440 = vadd.f32 %v417, %v429
      %v441 = vadd.f32 %v418, %v429
      %v442 = vadd.f32 %v419, %v429
      %v443 = vadd.f32 %v420, %v429
      %v444 = vadd.f32 %v421, %v429
      %v445 = vadd.f32 %v422, %v429
      %v446 = vadd.f32 %v423, %v429
      %v447 = vmax.f32 %v431, 0.0
      %v448 = vmax.f32 %v432, 0.0
      %v449 = vmax.f32 %v433, 0.0
      %v450 = vmax.f32 %v434, 0.0
      %v451 = vmax.f32 %v435, 0.0
      %v452 = vmax.f32 %v436, 0.0
      %v453 = vmax.f32 %v437, 0.0
      %v454 = vmax.f32 %v438, 0.0
      %v455 = vmax.f32 %v439, 0.0
      %v456 = vmax.f32 %v440, 0.0
      %v457 = vmax.f32 %v441, 0.0
      %v458 = vmax.f32 %v442, 0.0
      %v459 = vmax.f32 %v443, 0.0
      %v460 = vmax.f32 %v444, 0.0
      %v461 = vmax.f32 %v445, 0.0
      %v462 = vmax.f32 %v446, 0.0
      %v463 = vpack.c.bf16 %v448, %v447
      %v464 = vpack.c.bf16 %v450, %v449
      %v465 = vpack.c.bf16 %v452, %v451
      %v466 = vpack.c.bf16 %v454, %v453
      %v467 = vpack.c.bf16 %v456, %v455
      %v468 = vpack.c.bf16 %v458, %v457
      %v469 = vpack.c.bf16 %v460, %v459
      %v470 = vpack.c.bf16 %v462, %v461
      %v479 = vunpack.c.l.b16 %v463
      %v480 = vunpack.c.h.b16 %v463
      %v481 = vunpack.c.l.b16 %v464
      %v482 = vunpack.c.h.b16 %v464
      %v483 = vunpack.c.l.b16 %v465
      %v484 = vunpack.c.h.b16 %v465
      %v485 = vunpack.c.l.b16 %v466
      %v486 = vunpack.c.h.b16 %v466
      %v487 = vunpack.c.l.b16 %v467
      %v488 = vunpack.c.h.b16 %v467
      %v489 = vunpack.c.l.b16 %v468
      %v490 = vunpack.c.h.b16 %v468
      %v491 = vunpack.c.l.b16 %v469
      %v492 = vunpack.c.h.b16 %v469
      %v493 = vunpack.c.l.b16 %v470
      %v494 = vunpack.c.h.b16 %v470
      %v495 = vpack.c.b16 %v479, %v479
      %v496 = vpack.c.b16 %v480, %v480
      %v497 = vpack.c.b16 %v481, %v481
      %v498 = vpack.c.b16 %v482, %v482
      %v499 = vpack.c.b16 %v483, %v483
      %v500 = vpack.c.b16 %v484, %v484
      %v501 = vpack.c.b16 %v485, %v485
      %v502 = vpack.c.b16 %v486, %v486
      %v503 = vpack.c.b16 %v487, %v487
      %v504 = vpack.c.b16 %v488, %v488
      %v505 = vpack.c.b16 %v489, %v489
      %v506 = vpack.c.b16 %v490, %v490
      %v507 = vpack.c.b16 %v491, %v491
      %v508 = vpack.c.b16 %v492, %v492
      %v509 = vpack.c.b16 %v493, %v493
      %v510 = vpack.c.b16 %v494, %v494
      %527 = vst [vmem:[#allocation3] sm:$0xf] %v495
      %528 = vst [vmem:[#allocation3 + $0x4] sm:$0xf] %v496
      %529 = vst [vmem:[#allocation3 + $0x8] sm:$0xf] %v497
      %530 = vst [vmem:[#allocation3 + $0xc] sm:$0xf] %v498
      %531 = vst [vmem:[#allocation3 + $0x10] sm:$0xf] %v499
      %532 = vst [vmem:[#allocation3 + $0x14] sm:$0xf] %v500
      %533 = vst [vmem:[#allocation3 + $0x18] sm:$0xf] %v501
      %534 = vst [vmem:[#allocation3 + $0x1c] sm:$0xf] %v502
      %535 = vst [vmem:[#allocation3 + $0x20] sm:$0xf] %v503
      %536 = vst [vmem:[#allocation3 + $0x24] sm:$0xf] %v504
      %537 = vst [vmem:[#allocation3 + $0x28] sm:$0xf] %v505
      %538 = vst [vmem:[#allocation3 + $0x2c] sm:$0xf] %v506
      %539 = vst [vmem:[#allocation3 + $0x30] sm:$0xf] %v507
      %540 = vst [vmem:[#allocation3 + $0x34] sm:$0xf] %v508
      %541 = vst [vmem:[#allocation3 + $0x38] sm:$0xf] %v509
      %542 = vst [vmem:[#allocation3 + $0x3c] sm:$0xf] %v510
    $region21: #{_conv_gemm.1} parent=1 // pred_fallthru
      _
    // Predicated region
    $region22: #{_conv_gemm.1} parent=1 // pred_check
      _
    $region23: #{_conv_gemm.1} parent=1 // pred_check_branch
      %544 = sbr.rel (0) target = $region25
    $region24: #{_conv_gemm.1} parent=1 // pred_region
      %s546 = ssub.s32 1024, 1024
      %547 = vsyncadd [#allocation4], %s546
      %s548 = sshll.u32 [#allocation3], 4
      %s549 = int_to_ptr.vmem [resolvable:$true] %s548
      %554 = dma.vmem_to_hbm [thread:$0]  %s549, 1024, %s3, [#allocation4], 64, 64, 4
    $region25: #{_conv_gemm.1} parent=1 // pred_fallthru
      _
    // Predicated region
    $region26: #{_conv_gemm.1} parent=1 // pred_check
      _
    $region27: #{_conv_gemm.1} parent=1 // pred_check_branch
      %556 = sbr.rel (0) target = $region29
    $region28: #{_conv_gemm.1} parent=1 // pred_region
      %557 = dma.done [#allocation4], 1024
    $region29: #{_conv_gemm.1} parent=1 // pred_fallthru
      _
    %558 = vsyncpa [#allocation4], 1

</llo_original>
